<compile_context>
chip_gen: v6e
topology: v6e:2x2x1
jax: 0.10.0
libtpu: 0.0.40
codegen_flags: <defaults>
</compile_context>

<pallas_src>
import functools
import math

import jax
import jax.numpy as jnp
from jax.experimental import pallas as pl
from jax.experimental.pallas import tpu as pltpu


def _temp_scaling_kernel(x_ref, o_ref, *, logits_number):
    """One (R, D) input row-tile -> (R, D-1) output row-tile."""
    x = x_ref[...]                                   # (R, D), input dtype
    r, d = x.shape
    dm1 = d - 1
    L = logits_number

    if L <= 0:
        # No column is temperature-scaled: pure shifted copy.
        o_ref[...] = x[:, 1:].astype(o_ref.dtype)
        return

    # Shifted values, computed once (single pass over the tile).  For D <= 128
    # the shift is an in-vreg lane realign; for larger D the compiler's
    # realignment pass stays hidden under the HBM DMA of this mem-bound kernel.
    vals = x[:, 1:].astype(jnp.float32)              # (R, D-1) f32

    # Per-row inverse temperature 1/exp(x0) == exp(-x0): one EUP op per row
    # (separate VLIW slot) instead of a per-element VPU divide.
    inv = jnp.exp(-(x[:, :1].astype(jnp.float32)))   # (R, 1) f32

    if L >= dm1:
        # Every output column is temperature-scaled.
        scaled = vals * inv
    else:
        # Single full-width store: scale = exp(-x0) for cols < L, 1.0 after.
        # One vst path instead of two partial masked stores split at column L
        # (matters most on v5e's single vst slot); the cmp/select is free VPU
        # filler in this HBM-bound kernel.
        col = jax.lax.broadcasted_iota(jnp.int32, (r, dm1), 1)
        scaled = vals * jnp.where(col < L, inv, jnp.float32(1.0))

    o_ref[...] = scaled.astype(o_ref.dtype)


def temperature_scaling(x, logits_number, *, tile_rows=None):
    """Pallas TPU implementation of TemperatureScaling.forward.

    x: [..., D] -> out: [..., D-1]
    """
    orig_shape = x.shape
    d = orig_shape[-1]
    assert d >= 2, "need at least 2 features (x0 + one output column)"
    assert logits_number >= 0

    rows = math.prod(orig_shape[:-1]) if len(orig_shape) > 1 else 1
    x2 = x.reshape(rows, d)

    itemsize = jnp.dtype(x.dtype).itemsize
    # Native sublane packing multiple: 8 rows for 32-bit, 16 for 16-bit,
    # 32 for 8-bit dtypes (8-row bf16 blocks would half-fill vregs).
    rnd = max(8, 32 // max(1, itemsize))

    total_bytes = rows * d * itemsize
    if tile_rows is None:
        # ~1M elements per tile (~4 MiB f32 / 2 MiB bf16): top of the measured
        # tile-size vs HBM-roofline curve.  No artificial row cap, so narrow
        # last dims get correspondingly more rows per tile.
        target_elems = 1 << 20
        tile_rows = max(rnd, (target_elems // d) // rnd * rnd)
        if total_bytes > (1 << 20):
            # Keep >= 4 grid steps once the input is big enough: double-
            # buffered DMA/compute overlap + both v7x TensorCores engaged.
            steps_cap = ((rows + 3) // 4 + rnd - 1) // rnd * rnd
            tile_rows = min(tile_rows, max(rnd, steps_cap))

    if rows <= tile_rows:
        tile_rows = rows          # single block; full-dim block is always legal
    else:
        tile_rows = max(rnd, tile_rows // rnd * rnd)

    grid = (pl.cdiv(rows, tile_rows),)

    # VMEM budget from the actual footprint: double-buffered input + output
    # tiles plus headroom for in-kernel f32 temporaries, clamped to a range
    # safe on v7x (64 MiB physical per TC) as well as v5e/v6e (128 MiB).
    tile_in = tile_rows * d * itemsize
    tile_out = tile_rows * (d - 1) * itemsize
    footprint = 2 * (tile_in + tile_out) + 4 * tile_rows * d * 4
    vmem_bytes = int(min(48 << 20, max(32 << 20, footprint + (8 << 20))))

    # TODO(synk): for extremely wide last dims (D in the hundreds of thousands)
    # a 2-D grid that also tiles columns (with a separate (tile_rows, 1)
    # BlockSpec carrying x0 to every column tile) would be needed to bound
    # VMEM; not implemented here.
    # TODO(synk): if narrow-D (< 128) shapes dominate the workload, repack k
    # logical rows per kernel row in the wrapper so the output last dim becomes
    # a lane-dense multiple of 128 (biggest measured store-path lever).

    kernel = functools.partial(_temp_scaling_kernel, logits_number=logits_number)
    out2 = pl.pallas_call(
        kernel,
        out_shape=jax.ShapeDtypeStruct((rows, d - 1), x.dtype),
        grid=grid,
        in_specs=[pl.BlockSpec((tile_rows, d), lambda i: (i, 0))],
        out_specs=pl.BlockSpec((tile_rows, d - 1), lambda i: (i, 0)),
        compiler_params=pltpu.CompilerParams(
            dimension_semantics=("parallel",),
            vmem_limit_bytes=vmem_bytes,
        ),
    )(x2)
    return out2.reshape(*orig_shape[:-1], d - 1)


def _reference(x, logits_number):
    xf = x.astype(jnp.float32)
    temp = jnp.ones_like(xf)
    temp = temp.at[..., 1:logits_number + 1].set(jnp.exp(xf[..., :1]))
    return xf[..., 1:] / temp[..., 1:]


def _check(out, ref, atol, rtol):
    assert out.shape == ref.shape
    diff = jnp.max(jnp.abs(out.astype(jnp.float32) - ref))
    assert jnp.allclose(out.astype(jnp.float32), ref, atol=atol, rtol=rtol), float(diff)


if __name__ == "__main__":
    logits_number = 16
    key = jax.random.PRNGKey(0)
    k1, k2, k3 = jax.random.split(key, 3)

    # 1) Small single-block case (grid=(1,)), mixed scaled/unscaled columns.
    x = jax.random.normal(k1, (2, 4, 33), dtype=jnp.float32)
    out = jax.block_until_ready(temperature_scaling(x, logits_number))
    assert out.shape == (2, 4, 32)
    _check(out, _reference(x, logits_number), atol=1e-5, rtol=1e-5)

    # 2) Multi-tile pipelined path (grid=(3,)).
    x_big = jax.random.normal(k2, (3, 8, 33), dtype=jnp.float32)
    out_big = jax.block_until_ready(
        temperature_scaling(x_big, logits_number, tile_rows=8))
    assert out_big.shape == (3, 8, 32)
    _check(out_big, _reference(x_big, logits_number), atol=1e-5, rtol=1e-5)

    # 3) bf16 input, multi-tile (grid=(4,)); f32 math, rounded once at store.
    x_bf = jax.random.normal(k3, (4, 16, 33), dtype=jnp.bfloat16)
    out_bf = jax.block_until_ready(
        temperature_scaling(x_bf, logits_number, tile_rows=16))
    assert out_bf.shape == (4, 16, 32) and out_bf.dtype == jnp.bfloat16
    _check(out_bf, _reference(x_bf, logits_number), atol=2e-2, rtol=2e-2)

    # 4) All columns scaled (logits_number >= D-1) and none scaled (== 0).
    out_all = jax.block_until_ready(temperature_scaling(x, 32))
    _check(out_all, _reference(x, 32), atol=1e-5, rtol=1e-5)
    out_none = jax.block_until_ready(temperature_scaling(x, 0))
    _check(out_none, _reference(x, 0), atol=1e-5, rtol=1e-5)

    print("KERNEL_OK")
</pallas_src>

<mosaic_0001>
module attributes {stable_mosaic.version = 11 : i64} {
  func.func @_temp_scaling_kernel(%arg0: i32, %arg1: memref<8x33xf32, #tpu.memory_space<vmem>>, %arg2: memref<8x32xf32, #tpu.memory_space<vmem>>) attributes {dimension_semantics = [#tpu.dimension_semantics<parallel>], iteration_bounds = array<i64: 1>, scalar_prefetch = 0 : i64, scratch_operands = 0 : i64, tpu.core_type = #tpu.core_type<tc>, window_params = [{transform_indices = @transform_0, window_bounds = array<i64: 8, 33>}, {transform_indices = @transform_1, window_bounds = array<i64: 8, 32>}]} {
    %c0 = arith.constant 0 : index
    %c0_0 = arith.constant 0 : index
    %0 = vector.load %arg1[%c0, %c0_0] : memref<8x33xf32, #tpu.memory_space<vmem>>, vector<8x33xf32>
    %1 = vector.extract_strided_slice %0 {offsets = [0, 1], sizes = [8, 32], strides = [1, 1]} : vector<8x33xf32> to vector<8x32xf32>
    %2 = vector.extract_strided_slice %0 {offsets = [0, 0], sizes = [8, 1], strides = [1, 1]} : vector<8x33xf32> to vector<8x1xf32>
    %cst = arith.constant 0.000000e+00 : f32
    %3 = vector.broadcast %cst : f32 to vector<8x1xf32>
    %4 = arith.subf %3, %2 : vector<8x1xf32>
    %5 = math.exp %4 : vector<8x1xf32>
    %6 = tpu.iota {dimensions = array<i32: 1>} : vector<8x32xi32>
    %c16_i32 = arith.constant 16 : i32
    %7 = vector.broadcast %c16_i32 : i32 to vector<8x32xi32>
    %8 = arith.cmpi slt, %6, %7 : vector<8x32xi32>
    %cst_1 = arith.constant 1.000000e+00 : f32
    %9 = vector.shape_cast %5 : vector<8x1xf32> to vector<8x1xf32>
    %10 = vector.broadcast %9 : vector<8x1xf32> to vector<8x32xf32>
    %11 = vector.broadcast %cst_1 : f32 to vector<8x32xf32>
    %12 = arith.select %8, %10, %11 : vector<8x32xi1>, vector<8x32xf32>
    %13 = arith.mulf %1, %12 : vector<8x32xf32>
    %c0_2 = arith.constant 0 : index
    %c0_3 = arith.constant 0 : index
    %14 = vector.load %arg2[%c0_2, %c0_3] : memref<8x32xf32, #tpu.memory_space<vmem>>, vector<8x32xf32>
    tpu.vector_store %arg2[%c0_2, %c0_3], %13 {strides = array<i32>} : memref<8x32xf32, #tpu.memory_space<vmem>>, vector<8x32xf32>,
    return
  }
  func.func @transform_0(%arg0: i32) -> (i32, i32) {
    %c0_i32 = arith.constant 0 : i32
    %c0_i32_0 = arith.constant 0 : i32
    return %arg0, %c0_i32 : i32, i32
  }
  func.func @transform_1(%arg0: i32) -> (i32, i32) {
    %c0_i32 = arith.constant 0 : i32
    %c0_i32_0 = arith.constant 0 : i32
    return %arg0, %c0_i32 : i32, i32
  }
}

</mosaic_0001>

<llo_original>
// kernel: tpu_custom_call.1
$region0: #{tpu_custom_call.1}
  #allocation0 [shape = 'u32[]', space=smem, size = 0x4, offset = 0x4, fixed_abs, tag = 'smem constant byte address 0x4 - core index']
  #allocation1 [shape = 'u32[144,128]{1,0:T(1,128)}', space=vmem, size = 0x12000, scoped, tag = 'internal scratch']
  %s0 = inlined_call_operand.hbm [shape: f32[8,33], index: 0, kind: input, shape index: {}]
  %s1 = inlined_call_operand.hbm [shape: f32[8,32], index: 1, kind: output, shape index: {}]
  %s2 = sld [smem:[#allocation0]]
  $region18: #{tpu_custom_call.1} parent=0
    _
  %s4 = ssub.s32 1, %s2
  %s5 = scalar_select 0, %s4, %s2
  $region1: #{tpu_custom_call.1} parent=0
    #allocation2 [shape = 'u8[4096]{0}', space=vmem, size = 0x1000, scoped, tag = 'input window, operand 0, single buffered']
    #allocation3 [shape = 's32[1]{0}', space=sflag, size = 0x4, scoped, tag = 'scoped memory for tpu_custom_call.1']
    #allocation4 [shape = 's32[1]{0}', space=sflag, size = 0x4, scoped, tag = 'scoped memory for tpu_custom_call.1']
    #allocation5 [shape = 'u8[4096]{0}', space=vmem, size = 0x1000, scoped, tag = 'output window, operand 0, single buffered']
    %6 = vsyncpa [#allocation3], 0
    %7 = vsyncpa [#allocation4], 0
    // Predicated region
    $region2: #{tpu_custom_call.1} parent=1 // pred_check
      _
    $region3: #{tpu_custom_call.1} parent=1 // pred_check_branch
      %9 = sbr.rel (0) target = $region5
    $region4: #{tpu_custom_call.1} parent=1 // pred_region
      %s11 = ssub.s32 128, 128
      %12 = vsyncadd [#allocation3], %s11
      %s14 = sshll.u32 [#allocation2], 4
      %s15 = int_to_ptr.vmem [resolvable:$true] %s14
      %17 = dma.hbm_to_vmem [thread:$0]  %s0, 128, %s15, [#allocation3]
    $region5: #{tpu_custom_call.1} parent=1 // pred_fallthru
      _
    // Predicated region
    $region6: #{tpu_custom_call.1} parent=1 // pred_check
      _
    $region7: #{tpu_custom_call.1} parent=1 // pred_check_branch
      %19 = sbr.rel (0) target = $region9
    $region8: #{tpu_custom_call.1} parent=1 // pred_region
      %20 = dma.done [#allocation3], 128
    $region9: #{tpu_custom_call.1} parent=1 // pred_fallthru
      _
    %v21 = vld [vmem:[#allocation2] sm:$0xff]
    %v22 = vsub.f32 0.0, %v21
    %v23 = vmul.f32 %v22, 1.442695
    %v24 = vpow.pop %v23
    %v25 = vlaneseq
    %v26 = vand.u32 %v25, 127
    %vm27 = vcmp.lt.s32.totalorder %v26, 16
    %29 = vset.pattern.permute.xlu0 0
    %30 = vperm.xlu0 %29, %v24
    %v31 = vpop.permute.xlu0 %30
    %v33 = vsel %vm27, %v31, 1.0
    %35 = vrot.lane.b32.xlu0 %v33, 1
    %v36 = vpop.permute.xlu0 %35
    %v38 = vmul.f32 %v21, %v36
    %40 = vrot.lane.b32.xlu0 %v38, 127
    %v41 = vpop.permute.xlu0 %40
    %vm43 = vcmask 261120
    %44 = vst.msk [vmem:[#allocation5] sm:$0xff] %vm43, %v41
    // Predicated region
    $region10: #{tpu_custom_call.1} parent=1 // pred_check
      _
    $region11: #{tpu_custom_call.1} parent=1 // pred_check_branch
      %46 = sbr.rel (0) target = $region13
    $region12: #{tpu_custom_call.1} parent=1 // pred_region
      %s48 = ssub.s32 128, 128
      %49 = vsyncadd [#allocation4], %s48
      %s51 = sshll.u32 [#allocation5], 4
      %s52 = int_to_ptr.vmem [resolvable:$true] %s51
      %54 = dma.vmem_to_hbm [thread:$0]  %s52, 128, %s1, [#allocation4]
    $region13: #{tpu_custom_call.1} parent=1 // pred_fallthru
      _
    // Predicated region
    $region14: #{tpu_custom_call.1} parent=1 // pred_check
      _
    $region15: #{tpu_custom_call.1} parent=1 // pred_check_branch
      %56 = sbr.rel (0) target = $region17
    $region16: #{tpu_custom_call.1} parent=1 // pred_region
      %57 = dma.done [#allocation4], 128
    $region17: #{tpu_custom_call.1} parent=1 // pred_fallthru
      _
    %58 = vsyncpa [#allocation3], 1
    %59 = vsyncpa [#allocation4], 1

</llo_original>
